<compile_context>
chip_gen: v6e
topology: v6e:2x2x1
jax: 0.10.0
libtpu: 0.0.40
codegen_flags: <defaults>
</compile_context>

<pallas_src>
import math

import jax
import jax.numpy as jnp
from jax.experimental import pallas as pl
from jax.experimental.pallas import tpu as pltpu

_EPS = 1e-12


def _round_up(a: int, b: int) -> int:
    return ((a + b - 1) // b) * b


def _cdiv(a: int, b: int) -> int:
    return (a + b - 1) // b


def _sublane(dtype) -> int:
    # Sub-32-bit dtypes pack along sublanes: 8 (f32) / 16 (bf16) / 32 (int8).
    return max(8, 32 // jnp.dtype(dtype).itemsize)


def _hw_params():
    """(vmem_budget_bytes, vmem_limit_bytes_or_None, min_grid_steps) per TPU gen."""
    kind = ""
    try:
        kind = jax.devices()[0].device_kind.lower()
    except Exception:
        pass
    if "v7" in kind:
        # 64 MiB VMEM per TensorCore: keep pipelined buffers <= ~20 MiB, leave
        # the default scoped limit alone, and aim for >= 8 grid steps (2 TCs).
        return 20 << 20, None, 8
    if "v6" in kind:
        # 128 MiB VMEM: raise the scoped limit and use big tiles.
        return 48 << 20, 96 << 20, 1
    if "v5" in kind:
        # v5e: 16 MiB default scoped limit; raise it moderately (128 MiB phys).
        return 24 << 20, 64 << 20, 1
    # Unknown generation: stay inside the 16 MiB default scoped VMEM.
    return 10 << 20, None, 2


def _compiler_params(semantics, vmem_limit):
    kwargs = dict(dimension_semantics=semantics)
    if vmem_limit is not None:
        kwargs["vmem_limit_bytes"] = vmem_limit
    return pltpu.CompilerParams(**kwargs)


def _pick_tile(n, other, granule, bytes_per_elem, budget, min_steps):
    """Largest tile (multiple of `granule`) along the ragged axis `n` such that
    tile * other * bytes_per_elem fits the VMEM budget, with >= min_steps grid
    steps when possible."""
    if n <= granule:
        return n                            # full-extent block (always legal)
    per_unit = max(1, other * bytes_per_elem)
    t = max(1, budget // per_unit)
    t = max(granule, (t // granule) * granule)
    if min_steps > 1:
        cap = _round_up(_cdiv(n, min_steps), granule)
        t = min(t, max(granule, cap))
    t = min(t, _round_up(n, granule))
    # TODO(synk): if `other` is pathologically large even a single-granule tile
    # can exceed the budget; a multi-pass reduction would be needed there.
    return t


# --------------------------- kernel bodies -----------------------------------

def _l2norm_lastdim_kernel(x_ref, o_ref):
    # x_ref: (TM, D); normalize each row over the last (lane) axis.
    x = x_ref[...].astype(jnp.float32)
    ss = jnp.sum(x * x, axis=-1, keepdims=True)              # (TM, 1)
    inv = jax.lax.rsqrt(jnp.maximum(ss, _EPS * _EPS))         # EUP rsqrt
    o_ref[...] = (x * inv).astype(o_ref.dtype)


def _l2norm_packed_kernel(x_ref, seg_ref, o_ref):
    # Small-D fast path: each 128-lane row packs 128/D logical rows.
    # seg_ref is a constant 128x128 block-diagonal ones matrix (DxD blocks);
    # (x*x) @ seg performs the segmented sum-of-squares AND the in-segment
    # broadcast in a single MXU op (MXU is otherwise idle), keeping stores
    # lane-dense and unmasked.
    x = x_ref[...].astype(jnp.float32)
    ss = jnp.dot(x * x, seg_ref[...],
                 precision=jax.lax.Precision.HIGHEST,          # keep f32 accuracy
                 preferred_element_type=jnp.float32)
    inv = jax.lax.rsqrt(jnp.maximum(ss, _EPS * _EPS))
    o_ref[...] = (x * inv).astype(o_ref.dtype)


def _l2norm_middim_kernel(x_ref, o_ref):
    # x_ref: (C, TP); normalize along C (sublane axis) for every lane column.
    x = x_ref[...].astype(jnp.float32)
    ss = jnp.sum(x * x, axis=0, keepdims=True)                 # (1, TP)
    inv = jax.lax.rsqrt(jnp.maximum(ss, _EPS * _EPS))
    o_ref[...] = (x * inv).astype(o_ref.dtype)


# ------------------------------ wrapper ---------------------------------------

def l2_normalize(x, dim=1):
    """Pallas TPU implementation of torch.nn.functional.normalize(x, p=2, dim=dim)."""
    orig_shape = x.shape
    nd = x.ndim
    dim = dim % nd
    itemsize = jnp.dtype(x.dtype).itemsize
    sub = _sublane(x.dtype)

    budget, vmem_limit, min_steps = _hw_params()
    # Per-element VMEM estimate: in + out tiles, each double-buffered, plus
    # roughly two f32 temporaries inside the body.
    bytes_per_elem = 4 * itemsize + 8

    total = x.size
    cost = pl.CostEstimate(
        flops=3 * total,
        transcendentals=total // max(orig_shape[dim], 1),
        bytes_accessed=2 * total * itemsize,
    )

    if dim == nd - 1:
        # ---------------- Reduce along the last (lane) axis. ----------------
        D = orig_shape[-1]
        M = total // D

        packed = (0 < D < 128) and (128 % D == 0) and ((M * D) % 128 == 0)
        if packed:
            rows = (M * D) // 128
            x2 = x.reshape(rows, 128)                          # free reshape
            tm = _pick_tile(rows, 128, sub, bytes_per_elem, budget, min_steps)
            seg = (jnp.arange(128)[:, None] // D ==
                   jnp.arange(128)[None, :] // D).astype(jnp.float32)
            out = pl.pallas_call(
                _l2norm_packed_kernel,
                out_shape=jax.ShapeDtypeStruct((rows, 128), x.dtype),
                grid_spec=pltpu.PrefetchScalarGridSpec(
                    num_scalar_prefetch=0,
                    grid=(_cdiv(rows, tm),),
                    in_specs=[pl.BlockSpec((tm, 128), lambda i: (i, 0)),
                              pl.BlockSpec((128, 128), lambda i: (0, 0))],
                    out_specs=pl.BlockSpec((tm, 128), lambda i: (i, 0)),
                ),
                compiler_params=_compiler_params(("parallel",), vmem_limit),
                cost_estimate=cost,
            )(x2, seg)
            return out.reshape(orig_shape)

        x2 = x.reshape(M, D)
        tm = _pick_tile(M, D, sub, bytes_per_elem, budget, min_steps)
        out = pl.pallas_call(
            _l2norm_lastdim_kernel,
            out_shape=jax.ShapeDtypeStruct((M, D), x.dtype),
            grid_spec=pltpu.PrefetchScalarGridSpec(
                num_scalar_prefetch=0,
                grid=(_cdiv(M, tm),),
                in_specs=[pl.BlockSpec((tm, D), lambda i: (i, 0))],
                out_specs=pl.BlockSpec((tm, D), lambda i: (i, 0)),
            ),
            compiler_params=_compiler_params(("parallel",), vmem_limit),
            cost_estimate=cost,
        )(x2)
        return out.reshape(orig_shape)

    # -------- Reduce along a middle axis (e.g. NCHW channel dim=1). --------
    C = orig_shape[dim]
    pre = math.prod(orig_shape[:dim]) if dim > 0 else 1
    post = math.prod(orig_shape[dim + 1:])
    x2 = x.reshape(pre, C, post)                               # free reshape, no transpose

    lane_steps = max(1, _cdiv(min_steps, max(pre, 1)))
    tp = _pick_tile(post, C, 128, bytes_per_elem, budget, lane_steps)
    out = pl.pallas_call(
        _l2norm_middim_kernel,
        out_shape=jax.ShapeDtypeStruct((pre, C, post), x.dtype),
        grid_spec=pltpu.PrefetchScalarGridSpec(
            num_scalar_prefetch=0,
            grid=(pre, _cdiv(post, tp)),
            in_specs=[pl.BlockSpec((None, C, tp), lambda b, j: (b, 0, j))],
            out_specs=pl.BlockSpec((None, C, tp), lambda b, j: (b, 0, j)),
        ),
        compiler_params=_compiler_params(("parallel", "parallel"), vmem_limit),
        cost_estimate=cost,
    )(x2)
    return out.reshape(orig_shape)


def _reference(x, dim):
    ss = jnp.sum(jnp.square(x.astype(jnp.float32)), axis=dim, keepdims=True)
    denom = jnp.maximum(jnp.sqrt(ss), _EPS)
    return (x.astype(jnp.float32) / denom).astype(x.dtype)


if __name__ == "__main__":
    key = jax.random.PRNGKey(0)
    k1, k2, k3 = jax.random.split(key, 3)

    # Case 1: NCHW feature map, normalize over channels (module default dim=1).
    x1 = jax.random.normal(k1, (2, 4, 16, 16), dtype=jnp.float32)
    out1 = jax.block_until_ready(l2_normalize(x1, dim=1))
    ref1 = _reference(x1, dim=1)
    assert out1.shape == x1.shape, out1.shape
    assert jnp.allclose(out1, ref1, atol=1e-5, rtol=1e-5), float(
        jnp.max(jnp.abs(out1 - ref1)))

    # Case 2: (batch, feature) global descriptor, dim=1 is the last axis.
    x2 = jax.random.normal(k2, (2, 32), dtype=jnp.float32)
    out2 = jax.block_until_ready(l2_normalize(x2, dim=1))
    ref2 = _reference(x2, dim=1)
    assert out2.shape == x2.shape, out2.shape
    assert jnp.allclose(out2, ref2, atol=1e-5, rtol=1e-5), float(
        jnp.max(jnp.abs(out2 - ref2)))

    # Case 3: (batch, seq, hidden) tokens, normalize over the hidden axis
    # (exercises the lane-packed small-D MXU fast path).
    x3 = jax.random.normal(k3, (2, 8, 32), dtype=jnp.float32)
    out3 = jax.block_until_ready(l2_normalize(x3, dim=-1))
    ref3 = _reference(x3, dim=-1)
    assert out3.shape == x3.shape, out3.shape
    assert jnp.allclose(out3, ref3, atol=1e-5, rtol=1e-5), float(
        jnp.max(jnp.abs(out3 - ref3)))

    print("KERNEL_OK")
</pallas_src>

<mosaic_0001>
module attributes {stable_mosaic.version = 11 : i64} {
  func.func @_l2norm_middim_kernel(%arg0: i32, %arg1: i32, %arg2: memref<1x4x256xf32, #tpu.memory_space<vmem>>, %arg3: memref<1x4x256xf32, #tpu.memory_space<vmem>>) attributes {dimension_semantics = [#tpu.dimension_semantics<parallel>, #tpu.dimension_semantics<parallel>], iteration_bounds = array<i64: 2, 1>, scalar_prefetch = 0 : i64, scratch_operands = 0 : i64, tpu.core_type = #tpu.core_type<tc>, window_params = [{transform_indices = @transform_0, window_bounds = array<i64: 1, 4, 256>}, {transform_indices = @transform_1, window_bounds = array<i64: 1, 4, 256>}]} {
    %c0 = arith.constant 0 : index
    %c0_0 = arith.constant 0 : index
    %c0_1 = arith.constant 0 : index
    %0 = vector.load %arg2[%c0, %c0_0, %c0_1] : memref<1x4x256xf32, #tpu.memory_space<vmem>>, vector<1x4x256xf32>
    %1 = vector.shape_cast %0 : vector<1x4x256xf32> to vector<4x256xf32>
    %2 = arith.mulf %1, %1 : vector<4x256xf32>
    %cst = arith.constant dense<0.000000e+00> : vector<256xf32>
    %3 = vector.multi_reduction <add>, %2, %cst [0] : vector<4x256xf32> to vector<256xf32>
    %4 = vector.shape_cast %3 : vector<256xf32> to vector<1x256xf32>
    %cst_2 = arith.constant 1.000000e-24 : f32
    %5 = vector.broadcast %cst_2 : f32 to vector<1x256xf32>
    %6 = arith.maximumf %4, %5 : vector<1x256xf32>
    %7 = math.rsqrt %6 : vector<1x256xf32>
    %8 = vector.broadcast %7 : vector<1x256xf32> to vector<4x256xf32>
    %9 = arith.mulf %1, %8 : vector<4x256xf32>
    %c0_3 = arith.constant 0 : index
    %c0_4 = arith.constant 0 : index
    %c0_5 = arith.constant 0 : index
    %10 = vector.load %arg3[%c0_3, %c0_4, %c0_5] : memref<1x4x256xf32, #tpu.memory_space<vmem>>, vector<1x4x256xf32>
    %11 = vector.shape_cast %10 : vector<1x4x256xf32> to vector<4x256xf32>
    %12 = vector.shape_cast %9 : vector<4x256xf32> to vector<1x4x256xf32>
    tpu.vector_store %arg3[%c0_3, %c0_4, %c0_5], %12 {strides = array<i32>} : memref<1x4x256xf32, #tpu.memory_space<vmem>>, vector<1x4x256xf32>,
    return
  }
  func.func @transform_0(%arg0: i32, %arg1: i32) -> (i32, i32, i32) {
    %c0_i32 = arith.constant 0 : i32
    %c0_i32_0 = arith.constant 0 : i32
    return %arg0, %c0_i32, %arg1 : i32, i32, i32
  }
  func.func @transform_1(%arg0: i32, %arg1: i32) -> (i32, i32, i32) {
    %c0_i32 = arith.constant 0 : i32
    %c0_i32_0 = arith.constant 0 : i32
    return %arg0, %c0_i32, %arg1 : i32, i32, i32
  }
}

</mosaic_0001>

<llo_original>
// kernel: tpu_custom_call.1
$region0: #{tpu_custom_call.1}
  #allocation0 [shape = 'u32[]', space=smem, size = 0x4, offset = 0x4, fixed_abs, tag = 'smem constant byte address 0x4 - core index']
  #allocation1 [shape = 'u32[144,128]{1,0:T(1,128)}', space=vmem, size = 0x12000, scoped, tag = 'internal scratch']
  %s0 = inlined_call_operand.hbm [shape: f32[2,4,256], index: 0, kind: input, shape index: {}]
  %s1 = inlined_call_operand.hbm [shape: f32[2,4,256], index: 1, kind: output, shape index: {}]
  %s2 = sld [smem:[#allocation0]]
  $region41: #{tpu_custom_call.1} parent=0
    _
  %s4 = ssub.s32 1, %s2
  %s5 = scalar_select 0, %s4, %s2
  $region1: #{tpu_custom_call.1} parent=0
    #allocation2 [shape = 'u8[8192]{0}', space=vmem, size = 0x2000, scoped, tag = 'input window, operand 0']
    #allocation3 [shape = 's32[2]{0}', space=sflag, size = 0x8, scoped, tag = 'scoped memory for tpu_custom_call.1']
    #allocation4 [shape = 's32[2]{0}', space=sflag, size = 0x8, scoped, tag = 'scoped memory for tpu_custom_call.1']
    #allocation5 [shape = 'u8[8192]{0}', space=vmem, size = 0x2000, scoped, tag = 'output window, operand 0']
    %6 = vsyncpa [#allocation3], 0
    %s7 = scalar_lea.sflag [#allocation3], 1
    %8 = vsyncpa %s7, 0
    %9 = vsyncpa [#allocation4], 0
    %s10 = scalar_lea.sflag [#allocation4], 1
    %11 = vsyncpa %s10, 0
    loop: start=0, step=1, limit=4
    $region2: #{tpu_custom_call.1} parent=1 // loop_pre_header
      _
    $region3: #{tpu_custom_call.1} parent=1 // loop_header
      %s13 = sphi 0, %s17
      %p14 = scmp.ge.s32.totalorder %s13, 4
      %s20 = sphi 0, %s32
      %s21 = sphi 0, %s28
      %s22 = sphi 0, %s20
      %s23 = sphi 0, %s21
      %s24 = sphi 0, %s22
      %s25 = sphi 0, %s23
      %s37 = sphi 0, %s39
      %s40 = sphi 0, %s37
      %s41 = sphi 0, %s40
      %s57 = sphi 0, %s41
      %s65 = sphi 0, %s67
      %s68 = sphi 0, %s65
      %s69 = sphi 0, %s68
      %s85 = sphi 0, %s69
    $region4: #{tpu_custom_call.1} parent=1 // loop_header_branch
      %16 = sbr.rel (%p14) target = $region8
    $region5: #{tpu_custom_call.1} parent=1 // loop_body
      %s18 = ssub.s32 %s13, 1
      %s19 = ssub.s32 %s13, 2
      %s26 = sadd.s32 1, %s21
      %p27 = scmp.ge.s32.totalorder %s26, 1
      %s28 = scalar_select %p27, 0, %s26
      %s29 = sadd.s32 1, %s20
      %s30 = scalar_select %p27, %s29, %s20
      %p31 = scmp.ge.s32.totalorder %s30, 2
      %s32 = scalar_select %p31, 0, %s30
      %s33 = ssub.s32 %s20, %s32
      %s34 = ssub.s32 %s21, %s28
      %s35 = sor.u32 %s33, %s34
      %p36 = scmp.eq.s32.totalorder %s35, 0
      %s38 = sadd.s32 %s37, 1
      %s39 = scalar_select %p36, %s37, %s38
      %p42 = pneg %p36
      %p43 = scmp.eq.s32.totalorder %s13, 1
      %p44 = por %p42, %p43
      %p45 = scmp.ne.s32.totalorder %s37, %s40
      %p46 = scmp.eq.s32.totalorder %s13, 0
      %p47 = por %p45, %p46
      %p48 = scmp.ne.s32.totalorder %s37, %s40
      %p49 = scmp.eq.s32.totalorder %s18, 1
      %p50 = por %p48, %p49
      %p51 = scmp.ne.s32.totalorder %s40, %s41
      %p52 = scmp.eq.s32.totalorder %s18, 0
      %p53 = por %p51, %p52
      %p54 = scmp.ne.s32.totalorder %s40, %s41
      %p55 = scmp.eq.s32.totalorder %s19, 1
      %p56 = por %p54, %p55
      %p58 = scmp.ne.s32.totalorder %s41, %s57
      %p59 = scmp.eq.s32.totalorder %s19, 0
      %p60 = por %p58, %p59
      %s61 = ssub.s32 %s20, %s32
      %s62 = ssub.s32 %s21, %s28
      %s63 = sor.u32 %s61, %s62
      %p64 = scmp.eq.s32.totalorder %s63, 0
      %s66 = sadd.s32 %s65, 1
      %s67 = scalar_select %p64, %s65, %s66
      %p70 = pneg %p64
      %p71 = scmp.eq.s32.totalorder %s13, 1
      %p72 = por %p70, %p71
      %p73 = scmp.ne.s32.totalorder %s65, %s68
      %p74 = scmp.eq.s32.totalorder %s13, 0
      %p75 = por %p73, %p74
      %p76 = scmp.ne.s32.totalorder %s65, %s68
      %p77 = scmp.eq.s32.totalorder %s18, 1
      %p78 = por %p76, %p77
      %p79 = scmp.ne.s32.totalorder %s68, %s69
      %p80 = scmp.eq.s32.totalorder %s18, 0
      %p81 = por %p79, %p80
      %p82 = scmp.ne.s32.totalorder %s68, %s69
      %p83 = scmp.eq.s32.totalorder %s19, 1
      %p84 = por %p82, %p83
      %p86 = scmp.ne.s32.totalorder %s69, %s85
      %p87 = scmp.eq.s32.totalorder %s19, 0
      %p88 = por %p86, %p87
      %p89 = scmp.le.s32.totalorder 1, %s13
      %p90 = scmp.lt.s32.totalorder %s13, 3
      %p91 = pnand %p89, %p90
      %p92 = pneg %p91
      // Predicated region
      $region9: #{tpu_custom_call.1} parent=5 // pred_check
        _
      $region10: #{tpu_custom_call.1} parent=5 // pred_check_branch
        %94 = sbr.rel (%p91) target = $region12
      $region11: #{tpu_custom_call.1} parent=5 // pred_region
        %s95 = ssub.s32 %s13, 1
      $region12: #{tpu_custom_call.1} parent=5 // pred_fallthru
        _
      %p96 = scmp.lt.s32.totalorder %s13, 2
      // Predicated region
      $region13: #{tpu_custom_call.1} parent=5 // pred_check
        %p97 = pneg %p96
      $region14: #{tpu_custom_call.1} parent=5 // pred_check_branch
        %99 = sbr.rel (%p97) target = $region16
      $region15: #{tpu_custom_call.1} parent=5 // pred_region
        // Predicated region
        $region17: #{tpu_custom_call.1} parent=15 // pred_check
          %p100 = pneg %p47
        $region18: #{tpu_custom_call.1} parent=15 // pred_check_branch
          %102 = sbr.rel (%p100) target = $region20
        $region19: #{tpu_custom_call.1} parent=15 // pred_region
          %s103 = sand.u32 %s37, 1
          %s104 = scalar_lea.sflag [#allocation3], %s103
          %s105 = sand.u32 %s37, 1
          %s106 = smul.addr %s105, 8
          %s107 = scalar_lea.vmem [#allocation2], %s106
          %s108 = smul.u32 2, %s21
          %s110 = ssub.s32 128, 128
          %111 = vsyncadd %s104, %s110
          %s112 = smul.addr %s20, 2
          %s113 = sadd.s32 %s108, %s112
          %s114 = smul.addr %s113, 64
          %s115 = scalar_lea.hbm %s0, %s114
          %s117 = sshll.u32 %s107, 4
          %s118 = int_to_ptr.vmem [resolvable:$true] %s117
          %120 = dma.hbm_to_vmem [thread:$0]  %s115, 128, %s118, %s104
        $region20: #{tpu_custom_call.1} parent=15 // pred_fallthru
          _
      $region16: #{tpu_custom_call.1} parent=5 // pred_fallthru
        _
      %p121 = scmp.le.s32.totalorder 1, %s13
      %p122 = scmp.lt.s32.totalorder %s13, 3
      %p123 = pnand %p121, %p122
      %p124 = pneg %p123
      // Predicated region
      $region21: #{tpu_custom_call.1} parent=5 // pred_check
        _
      $region22: #{tpu_custom_call.1} parent=5 // pred_check_branch
        %126 = sbr.rel (%p123) target = $region24
      $region23: #{tpu_custom_call.1} parent=5 // pred_region
        %s127 = ssub.s32 %s13, 1
        %s128 = sand.u32 %s40, 1
        %s129 = scalar_lea.sflag [#allocation3], %s128
        %s130 = sand.u32 %s40, 1
        %s131 = smul.addr %s130, 8
        %s132 = scalar_lea.vmem [#allocation2], %s131
        // Predicated region
        $region25: #{tpu_custom_call.1} parent=23 // pred_check
          %p133 = pneg %p53
        $region26: #{tpu_custom_call.1} parent=23 // pred_check_branch
          %135 = sbr.rel (%p133) target = $region28
        $region27: #{tpu_custom_call.1} parent=23 // pred_region
          %136 = dma.done %s129, 128
        $region28: #{tpu_custom_call.1} parent=23 // pred_fallthru
          _
        %s137 = sand.u32 %s40, 1
        %s138 = scalar_lea.sflag [#allocation3], %s137
        %s139 = sand.u32 %s40, 1
        %s140 = smul.addr %s139, 8
        %s141 = scalar_lea.vmem [#allocation2], %s140
        %p142 = pneg %p53
        %p143 = pneg %p50
        %p144 = pneg %p81
        %p145 = pneg %p78
        %s146 = sand.u32 %s68, 1
        %s147 = scalar_lea.sflag [#allocation4], %s146
        %s148 = sand.u32 %s68, 1
        %s149 = smul.addr %s148, 8
        %s150 = scalar_lea.vmem [#allocation5], %s149
        %s151 = smul.u32 2, %s23
        %s152 = smul.u32 2, %s23
        %v153 = vld [vmem:[%s132] sm:$0xff]
        %v154 = vmul.f32 %v153, %v153
        %v156 = vcombine.high %v154, %v154
        %vm158 = vcmask 1043456
        %v159 = vsel %vm158, %v154, 0.0
        %v160 = vrot.slane %v159, 4
        %v161 = vadd.f32 %v159, %v160
        %v162 = vrot.slane %v161, 2
        %v163 = vadd.f32 %v161, %v162
        %v164 = vrot.slane %v163, 1
        %v165 = vadd.f32 %v163, %v164
        %v166 = vsel %vm158, %v156, 0.0
        %v167 = vrot.slane %v166, 4
        %v168 = vadd.f32 %v166, %v167
        %v169 = vrot.slane %v168, 2
        %v170 = vadd.f32 %v168, %v169
        %v171 = vrot.slane %v170, 1
        %v172 = vadd.f32 %v170, %v171
        %v173 = vmax.f32 %v165, 1e-24
        %v174 = vmax.f32 %v172, 1e-24
        %v175 = vrsqrt.pop %v173
        %v176 = vrsqrt.pop %v174
        %v179 = vcombine.low %v175, %v176
        %v181 = vmul.f32 %v153, %v179
        %182 = vst [vmem:[%s150] sm:$0xff] %v181
        %s183 = sand.u32 %s68, 1
        %s184 = scalar_lea.sflag [#allocation4], %s183
        %s185 = sand.u32 %s68, 1
        %s186 = smul.addr %s185, 8
        %s187 = scalar_lea.vmem [#allocation5], %s186
        // Predicated region
        $region29: #{tpu_custom_call.1} parent=23 // pred_check
          %p188 = pneg %p78
        $region30: #{tpu_custom_call.1} parent=23 // pred_check_branch
          %190 = sbr.rel (%p188) target = $region32
        $region31: #{tpu_custom_call.1} parent=23 // pred_region
          %s191 = smul.u32 2, %s23
          %s193 = ssub.s32 128, 128
          %194 = vsyncadd %s184, %s193
          %s195 = smul.addr %s22, 2
          %s196 = sadd.s32 %s191, %s195
          %s197 = smul.addr %s196, 64
          %s198 = scalar_lea.hbm %s1, %s197
          %s200 = sshll.u32 %s187, 4
          %s201 = int_to_ptr.vmem [resolvable:$true] %s200
          %203 = dma.vmem_to_hbm [thread:$0]  %s201, 128, %s198, %s184
        $region32: #{tpu_custom_call.1} parent=23 // pred_fallthru
          _
      $region24: #{tpu_custom_call.1} parent=5 // pred_fallthru
        _
      %p204 = scmp.le.s32.totalorder 2, %s13
      // Predicated region
      $region33: #{tpu_custom_call.1} parent=5 // pred_check
        %p205 = pneg %p204
      $region34: #{tpu_custom_call.1} parent=5 // pred_check_branch
        %207 = sbr.rel (%p205) target = $region36
      $region35: #{tpu_custom_call.1} parent=5 // pred_region
        %s208 = ssub.s32 %s13, 2
        // Predicated region
        $region37: #{tpu_custom_call.1} parent=35 // pred_check
          %p209 = pneg %p84
        $region38: #{tpu_custom_call.1} parent=35 // pred_check_branch
          %211 = sbr.rel (%p209) target = $region40
        $region39: #{tpu_custom_call.1} parent=35 // pred_region
          %s212 = sand.u32 %s69, 1
          %s213 = scalar_lea.sflag [#allocation4], %s212
          %s214 = sand.u32 %s69, 1
          %s215 = smul.addr %s214, 8
          %s216 = scalar_lea.vmem [#allocation5], %s215
          %217 = dma.done %s213, 128
        $region40: #{tpu_custom_call.1} parent=35 // pred_fallthru
          _
      $region36: #{tpu_custom_call.1} parent=5 // pred_fallthru
        _
    $region6: #{tpu_custom_call.1} parent=1 // loop_footer
      %s17 = sadd.s32 1, %s13
    $region7: #{tpu_custom_call.1} parent=1 // loop_footer_branch
      %12 = sbr.rel target = $region3
    $region8: #{tpu_custom_call.1} parent=1 // loop_exit
      _
    %218 = vsyncpa [#allocation3], 1
    %s219 = scalar_lea.sflag [#allocation3], 1
    %220 = vsyncpa %s219, 1
    %221 = vsyncpa [#allocation4], 1
    %s222 = scalar_lea.sflag [#allocation4], 1
    %223 = vsyncpa %s222, 1

</llo_original>
